<compile_context>
chip_gen: v7x
topology: tpu7x:2x2x1
jax: 0.10.0
libtpu: 0.0.40
codegen_flags: <defaults>
</compile_context>

<pallas_src>
import jax
import jax.numpy as jnp
from jax.experimental import pallas as pl
from jax.experimental.pallas import tpu as pltpu


def _round_up(x, m):
    return ((x + m - 1) // m) * m


def _supv_localize_kernel(
    fused_ref,    # (tT, tB, D)   block of fused_content
    selfv_ref,    # (tT, tB, D)   block of self_visual
    wc_ref,       # (1, D)        classifier weight (row vector)
    bc_ref,       # (1, 1)        classifier bias
    wh_ref,       # (D, 2*C)      [event_classifier | event_self] weights
    bh_ref,       # (1, 2*C)      [event_classifier | event_self] biases
    logits_ref,   # (tT, tB)      per-token logits (squeezed block of (nb, Tp, tB))
    cls_ref,      # (tB, C)       class_scores
    self_ref,     # (tB, C)       class_self
    maxf_ref,     # (tB, D) f32   running max of fused_content over time
    maxs_ref,     # (tB, D) f32   running max of self_visual over time
):
    t = pl.program_id(1)
    nt = pl.num_programs(1)

    fused = fused_ref[...].astype(jnp.float32)   # (tT, tB, D)
    selfv = selfv_ref[...].astype(jnp.float32)

    @pl.when(t == 0)
    def _init():
        maxf_ref[...] = jnp.full_like(maxf_ref, -jnp.inf)
        maxs_ref[...] = jnp.full_like(maxs_ref, -jnp.inf)

    # running max over the time axis (PyTorch: x.transpose(1,0).max(1))
    maxf_ref[...] = jnp.maximum(maxf_ref[...], jnp.max(fused, axis=0))
    maxs_ref[...] = jnp.maximum(maxs_ref[...], jnp.max(selfv, axis=0))

    # per-token logits: <x, w> + b  -> (tT, tB); VPU multiply + lane reduction.
    w_row = wc_ref[...]                                        # (1, D)
    lg = jnp.sum(fused * w_row[None, :, :], axis=-1) + bc_ref[...]
    logits_ref[...] = lg.astype(logits_ref.dtype)

    # classification heads: single fused MXU pass, only on the final time block.
    @pl.when(t == nt - 1)
    def _finalize():
        tb = cls_ref.shape[0]
        n_cls = cls_ref.shape[1]
        maxes = jnp.concatenate([maxf_ref[...], maxs_ref[...]], axis=0)   # (2*tB, D)
        heads = (
            jnp.dot(maxes, wh_ref[...], preferred_element_type=jnp.float32)
            + bh_ref[...]
        )                                                                  # (2*tB, 2*C)
        cls_ref[...] = heads[:tb, :n_cls].astype(cls_ref.dtype)
        self_ref[...] = heads[tb:, n_cls:].astype(self_ref.dtype)


def supv_localize_module(fused_content, self_visual, params, *, t_block=None,
                         b_block=None, vmem_budget_bytes=4 * 1024 * 1024):
    """Pallas forward pass of SupvLocalizeModule.

    fused_content, self_visual: (T, B, D) float arrays (any float dtype; the HBM
    stream keeps the input dtype, all compute is f32).
    Returns (logits (T,B,1), class_scores (B,C), class_self (B,C)) in float32.
    """
    T, B, D = fused_content.shape
    assert self_visual.shape == (T, B, D)
    n_cls = params["we"].shape[1]

    # Fuse the two heads into one weight/bias slab -> one MXU pass in-kernel.
    wh = jnp.concatenate([params["we"], params["ws"]], axis=1)   # (D, 2C)
    bh = jnp.concatenate([params["be"], params["bs"]], axis=1)   # (1, 2C)
    wc = params["wc"].reshape(1, D)                              # (1, D)
    bc = params["bc"].reshape(1, 1)                              # (1, 1)

    itemsize = jnp.dtype(fused_content.dtype).itemsize

    # Batch tiling: split across TensorCores only when chunks stay >= 8 rows.
    if b_block is None:
        b_block = B // 2 if (B % 16 == 0) else B
    assert B % b_block == 0 and (b_block == B or b_block % 8 == 0)
    nb = B // b_block

    # Time tiling: largest multiple-of-8 block whose input slab fits the budget.
    if t_block is None:
        rows = vmem_budget_bytes // max(1, b_block * D * itemsize)
        t_block = min(max(rows, 8), 1024, _round_up(T, 8))
    t_block = max(8, (int(t_block) // 8) * 8)

    Tp = _round_up(T, t_block)
    nt = Tp // t_block
    if Tp != T:
        # Replicate the last time step: keeps the running max exact; the padded
        # logits rows are sliced off below.
        pad = ((0, Tp - T), (0, 0), (0, 0))
        fused_content = jnp.pad(fused_content, pad, mode="edge")
        self_visual = jnp.pad(self_visual, pad, mode="edge")

    grid_spec = pltpu.PrefetchScalarGridSpec(
        num_scalar_prefetch=0,
        grid=(nb, nt),
        in_specs=[
            pl.BlockSpec((t_block, b_block, D), lambda b, t: (t, b, 0)),
            pl.BlockSpec((t_block, b_block, D), lambda b, t: (t, b, 0)),
            # weights/biases: constant index maps -> DMA'd once, VMEM-resident.
            pl.BlockSpec((1, D), lambda b, t: (0, 0)),
            pl.BlockSpec((1, 1), lambda b, t: (0, 0)),
            pl.BlockSpec((D, 2 * n_cls), lambda b, t: (0, 0)),
            pl.BlockSpec((1, 2 * n_cls), lambda b, t: (0, 0)),
        ],
        out_specs=[
            pl.BlockSpec((None, t_block, b_block), lambda b, t: (b, t, 0)),
            pl.BlockSpec((b_block, n_cls), lambda b, t: (b, 0)),
            pl.BlockSpec((b_block, n_cls), lambda b, t: (b, 0)),
        ],
        scratch_shapes=[
            pltpu.VMEM((b_block, D), jnp.float32),
            pltpu.VMEM((b_block, D), jnp.float32),
        ],
    )

    block_bytes = t_block * b_block * D * itemsize
    vmem_limit = int(min(64 * 1024 * 1024,
                         max(8 * 1024 * 1024, 6 * block_bytes + (2 << 20))))

    out_shapes = (
        jax.ShapeDtypeStruct((nb, Tp, b_block), jnp.float32),   # logits slab
        jax.ShapeDtypeStruct((B, n_cls), jnp.float32),
        jax.ShapeDtypeStruct((B, n_cls), jnp.float32),
    )

    logits_slab, class_scores, class_self = pl.pallas_call(
        _supv_localize_kernel,
        out_shape=out_shapes,
        grid_spec=grid_spec,
        compiler_params=pltpu.CompilerParams(
            dimension_semantics=("parallel", "arbitrary"),
            vmem_limit_bytes=vmem_limit,
        ),
    )(fused_content, self_visual, wc, bc, wh, bh)

    # (nb, Tp, b_block) -> (T, B, 1) to match the PyTorch module's output layout.
    logits = jnp.transpose(logits_slab, (1, 0, 2)).reshape(Tp, B)[:T, :, None]
    return logits, class_scores, class_self


def init_params(key, d_model, n_cls=28):
    """Deterministic synthetic parameters (shapes match the nn.Linear layers)."""
    k1, k2, k3, k4, k5, k6 = jax.random.split(key, 6)
    scale = 1.0 / jnp.sqrt(jnp.float32(d_model))
    u = lambda k, shape: jax.random.uniform(k, shape, jnp.float32, -scale, scale)
    return {
        "wc": u(k1, (1, d_model)),       # classifier: Linear(d_model, 1) (row)
        "bc": u(k2, (1, 1)),
        "we": u(k3, (d_model, n_cls)),   # event_classifier: Linear(d_model, 28)
        "be": u(k4, (1, n_cls)),
        "ws": u(k5, (d_model, n_cls)),   # event_self: Linear(d_model, 28)
        "bs": u(k6, (1, n_cls)),
    }


def _reference(fused_content, self_visual, params):
    f32 = jnp.float32
    max_f = jnp.max(fused_content.astype(f32), axis=0)
    max_s = jnp.max(self_visual.astype(f32), axis=0)
    logits = (
        jnp.sum(fused_content.astype(f32) * params["wc"][0], axis=-1, keepdims=True)
        + params["bc"][0, 0]
    )
    class_scores = max_f @ params["we"] + params["be"]
    class_self = max_s @ params["ws"] + params["bs"]
    return logits, class_scores, class_self


if __name__ == "__main__":
    key = jax.random.PRNGKey(0)
    k1, k2, kp = jax.random.split(key, 3)

    T, B, D = 16, 2, 32          # seq=16, batch=2, d_model=32
    fused = jax.random.normal(k1, (T, B, D), jnp.float32)
    selfv = jax.random.normal(k2, (T, B, D), jnp.float32)
    params = init_params(kp, D)

    # t_block=8 -> two time blocks: exercises the running-max accumulator and the
    # pl.when init / finalize phases on top of the double-buffered stream.
    logits, class_scores, class_self = jax.block_until_ready(
        supv_localize_module(fused, selfv, params, t_block=8)
    )

    ref_logits, ref_cls, ref_self = _reference(fused, selfv, params)
    assert logits.shape == (T, B, 1)
    assert class_scores.shape == (B, 28)
    assert class_self.shape == (B, 28)
    assert jnp.allclose(logits, ref_logits, atol=1e-4)
    assert jnp.allclose(class_scores, ref_cls, atol=1e-4)
    assert jnp.allclose(class_self, ref_self, atol=1e-4)

    # Ragged T (exercises edge padding of the last time block).
    T2 = 13
    f2, s2 = fused[:T2], selfv[:T2]
    l2, c2, cs2 = jax.block_until_ready(
        supv_localize_module(f2, s2, params, t_block=8)
    )
    rl2, rc2, rcs2 = _reference(f2, s2, params)
    assert l2.shape == (T2, B, 1)
    assert jnp.allclose(l2, rl2, atol=1e-4)
    assert jnp.allclose(c2, rc2, atol=1e-4)
    assert jnp.allclose(cs2, rcs2, atol=1e-4)

    # bf16 HBM stream (memory-bound kernel -> ~2x less input traffic);
    # compute stays f32 in-kernel.
    lb, cb, csb = jax.block_until_ready(
        supv_localize_module(fused.astype(jnp.bfloat16),
                             selfv.astype(jnp.bfloat16), params, t_block=8)
    )
    assert jnp.allclose(lb, ref_logits, atol=0.15)
    assert jnp.allclose(cb, ref_cls, atol=0.15)
    assert jnp.allclose(csb, ref_self, atol=0.15)

    print("KERNEL_OK")
</pallas_src>

<mosaic_0001>
module attributes {stable_mosaic.version = 11 : i64} {
  func.func @_supv_localize_kernel(%arg0: i32, %arg1: i32, %arg2: memref<8x2x32xf32, #tpu.memory_space<vmem>>, %arg3: memref<8x2x32xf32, #tpu.memory_space<vmem>>, %arg4: memref<1x32xf32, #tpu.memory_space<vmem>>, %arg5: memref<1x1xf32, #tpu.memory_space<vmem>>, %arg6: memref<32x56xf32, #tpu.memory_space<vmem>>, %arg7: memref<1x56xf32, #tpu.memory_space<vmem>>, %arg8: memref<1x8x2xf32, #tpu.memory_space<vmem>>, %arg9: memref<2x28xf32, #tpu.memory_space<vmem>>, %arg10: memref<2x28xf32, #tpu.memory_space<vmem>>, %arg11: memref<2x32xf32, #tpu.memory_space<vmem>>, %arg12: memref<2x32xf32, #tpu.memory_space<vmem>>) attributes {dimension_semantics = [#tpu.dimension_semantics<parallel>, #tpu.dimension_semantics<arbitrary>], iteration_bounds = array<i64: 1, 2>, scalar_prefetch = 0 : i64, scratch_operands = 2 : i64, tpu.core_type = #tpu.core_type<tc>, window_params = [{transform_indices = @transform_0, window_bounds = array<i64: 8, 2, 32>}, {transform_indices = @transform_1, window_bounds = array<i64: 8, 2, 32>}, {pipeline_mode = #tpu.pipeline_mode<synchronous>, transform_indices = @transform_2, window_bounds = array<i64: 1, 32>}, {pipeline_mode = #tpu.pipeline_mode<synchronous>, transform_indices = @transform_3, window_bounds = array<i64: 1, 1>}, {pipeline_mode = #tpu.pipeline_mode<synchronous>, transform_indices = @transform_4, window_bounds = array<i64: 32, 56>}, {pipeline_mode = #tpu.pipeline_mode<synchronous>, transform_indices = @transform_5, window_bounds = array<i64: 1, 56>}, {transform_indices = @transform_6, window_bounds = array<i64: 1, 8, 2>}, {transform_indices = @transform_7, window_bounds = array<i64: 2, 28>}, {transform_indices = @transform_8, window_bounds = array<i64: 2, 28>}]} {
    %c0 = arith.constant 0 : index
    %c0_0 = arith.constant 0 : index
    %c0_1 = arith.constant 0 : index
    %0 = vector.load %arg2[%c0, %c0_0, %c0_1] : memref<8x2x32xf32, #tpu.memory_space<vmem>>, vector<8x2x32xf32>
    %c0_2 = arith.constant 0 : index
    %c0_3 = arith.constant 0 : index
    %c0_4 = arith.constant 0 : index
    %1 = vector.load %arg3[%c0_2, %c0_3, %c0_4] : memref<8x2x32xf32, #tpu.memory_space<vmem>>, vector<8x2x32xf32>
    %c0_i32 = arith.constant 0 : i32
    %2 = arith.cmpi eq, %arg1, %c0_i32 : i32
    %3 = arith.extui %2 : i1 to i32
    %c0_i32_5 = arith.constant 0 : i32
    %4 = arith.cmpi ne, %3, %c0_i32_5 : i32
    scf.if %4 {
      %cst_24 = arith.constant 0xFF800000 : f32
      %27 = vector.broadcast %cst_24 : f32 to vector<2x32xf32>
      %c0_25 = arith.constant 0 : index
      %c0_26 = arith.constant 0 : index
      %28 = vector.load %arg11[%c0_25, %c0_26] : memref<2x32xf32, #tpu.memory_space<vmem>>, vector<2x32xf32>
      tpu.vector_store %arg11[%c0_25, %c0_26], %27 {strides = array<i32>} : memref<2x32xf32, #tpu.memory_space<vmem>>, vector<2x32xf32>,
      %cst_27 = arith.constant 0xFF800000 : f32
      %29 = vector.broadcast %cst_27 : f32 to vector<2x32xf32>
      %c0_28 = arith.constant 0 : index
      %c0_29 = arith.constant 0 : index
      %30 = vector.load %arg12[%c0_28, %c0_29] : memref<2x32xf32, #tpu.memory_space<vmem>>, vector<2x32xf32>
      tpu.vector_store %arg12[%c0_28, %c0_29], %29 {strides = array<i32>} : memref<2x32xf32, #tpu.memory_space<vmem>>, vector<2x32xf32>,
    } else {
    }
    %c0_6 = arith.constant 0 : index
    %c0_7 = arith.constant 0 : index
    %5 = vector.load %arg11[%c0_6, %c0_7] : memref<2x32xf32, #tpu.memory_space<vmem>>, vector<2x32xf32>
    %cst = arith.constant dense<0xFF800000> : vector<2x32xf32>
    %6 = vector.multi_reduction <maximumf>, %0, %cst [0] : vector<8x2x32xf32> to vector<2x32xf32>
    %7 = arith.maximumf %5, %6 : vector<2x32xf32>
    %c0_8 = arith.constant 0 : index
    %c0_9 = arith.constant 0 : index
    %8 = vector.load %arg11[%c0_8, %c0_9] : memref<2x32xf32, #tpu.memory_space<vmem>>, vector<2x32xf32>
    tpu.vector_store %arg11[%c0_8, %c0_9], %7 {strides = array<i32>} : memref<2x32xf32, #tpu.memory_space<vmem>>, vector<2x32xf32>,
    %c0_10 = arith.constant 0 : index
    %c0_11 = arith.constant 0 : index
    %9 = vector.load %arg12[%c0_10, %c0_11] : memref<2x32xf32, #tpu.memory_space<vmem>>, vector<2x32xf32>
    %cst_12 = arith.constant dense<0xFF800000> : vector<2x32xf32>
    %10 = vector.multi_reduction <maximumf>, %1, %cst_12 [0] : vector<8x2x32xf32> to vector<2x32xf32>
    %11 = arith.maximumf %9, %10 : vector<2x32xf32>
    %c0_13 = arith.constant 0 : index
    %c0_14 = arith.constant 0 : index
    %12 = vector.load %arg12[%c0_13, %c0_14] : memref<2x32xf32, #tpu.memory_space<vmem>>, vector<2x32xf32>
    tpu.vector_store %arg12[%c0_13, %c0_14], %11 {strides = array<i32>} : memref<2x32xf32, #tpu.memory_space<vmem>>, vector<2x32xf32>,
    %c0_15 = arith.constant 0 : index
    %c0_16 = arith.constant 0 : index
    %13 = vector.load %arg4[%c0_15, %c0_16] : memref<1x32xf32, #tpu.memory_space<vmem>>, vector<1x32xf32>
    %14 = vector.shape_cast %13 : vector<1x32xf32> to vector<1x1x32xf32>
    %15 = vector.broadcast %14 : vector<1x1x32xf32> to vector<8x2x32xf32>
    %16 = arith.mulf %0, %15 : vector<8x2x32xf32>
    %cst_17 = arith.constant dense<0.000000e+00> : vector<8x2xf32>
    %17 = vector.multi_reduction <add>, %16, %cst_17 [2] : vector<8x2x32xf32> to vector<8x2xf32>
    %c0_18 = arith.constant 0 : index
    %c0_19 = arith.constant 0 : index
    %18 = vector.load %arg5[%c0_18, %c0_19] : memref<1x1xf32, #tpu.memory_space<vmem>>, vector<1x1xf32>
    %19 = vector.broadcast %18 : vector<1x1xf32> to vector<8x2xf32>
    %20 = arith.addf %17, %19 : vector<8x2xf32>
    %c0_20 = arith.constant 0 : index
    %c0_21 = arith.constant 0 : index
    %c0_22 = arith.constant 0 : index
    %21 = vector.load %arg8[%c0_20, %c0_21, %c0_22] : memref<1x8x2xf32, #tpu.memory_space<vmem>>, vector<1x8x2xf32>
    %22 = vector.shape_cast %21 : vector<1x8x2xf32> to vector<8x2xf32>
    %23 = vector.shape_cast %20 : vector<8x2xf32> to vector<1x8x2xf32>
    tpu.vector_store %arg8[%c0_20, %c0_21, %c0_22], %23 {strides = array<i32>} : memref<1x8x2xf32, #tpu.memory_space<vmem>>, vector<1x8x2xf32>,
    %c1_i32 = arith.constant 1 : i32
    %24 = arith.cmpi eq, %arg1, %c1_i32 : i32
    %25 = arith.extui %24 : i1 to i32
    %c0_i32_23 = arith.constant 0 : i32
    %26 = arith.cmpi ne, %25, %c0_i32_23 : i32
    scf.if %26 {
      %c0_24 = arith.constant 0 : index
      %c0_25 = arith.constant 0 : index
      %27 = vector.load %arg11[%c0_24, %c0_25] : memref<2x32xf32, #tpu.memory_space<vmem>>, vector<2x32xf32>
      %c0_26 = arith.constant 0 : index
      %c0_27 = arith.constant 0 : index
      %28 = vector.load %arg12[%c0_26, %c0_27] : memref<2x32xf32, #tpu.memory_space<vmem>>, vector<2x32xf32>
      %29 = tpu.concatenate %27, %28 in 0 : vector<2x32xf32>, vector<2x32xf32> -> vector<4x32xf32>
      %c0_28 = arith.constant 0 : index
      %c0_29 = arith.constant 0 : index
      %30 = vector.load %arg6[%c0_28, %c0_29] : memref<32x56xf32, #tpu.memory_space<vmem>>, vector<32x56xf32>
      %cst_30 = arith.constant dense<0.000000e+00> : vector<4x56xf32>
      %31 = tpu.matmul %29, %30, %cst_30 {dimension_numbers = #tpu.dot_dimension_numbers<[1], [0], [0], [1], [0, 0, 1, 1], [], []>} : vector<4x32xf32>, vector<32x56xf32>, vector<4x56xf32> -> vector<4x56xf32>
      %c0_31 = arith.constant 0 : index
      %c0_32 = arith.constant 0 : index
      %32 = vector.load %arg7[%c0_31, %c0_32] : memref<1x56xf32, #tpu.memory_space<vmem>>, vector<1x56xf32>
      %33 = vector.broadcast %32 : vector<1x56xf32> to vector<4x56xf32>
      %34 = arith.addf %31, %33 : vector<4x56xf32>
      %35 = vector.extract_strided_slice %34 {offsets = [0, 0], sizes = [2, 28], strides = [1, 1]} : vector<4x56xf32> to vector<2x28xf32>
      %c0_33 = arith.constant 0 : index
      %c0_34 = arith.constant 0 : index
      %36 = vector.load %arg9[%c0_33, %c0_34] : memref<2x28xf32, #tpu.memory_space<vmem>>, vector<2x28xf32>
      tpu.vector_store %arg9[%c0_33, %c0_34], %35 {strides = array<i32>} : memref<2x28xf32, #tpu.memory_space<vmem>>, vector<2x28xf32>,
      %37 = vector.extract_strided_slice %34 {offsets = [2, 28], sizes = [2, 28], strides = [1, 1]} : vector<4x56xf32> to vector<2x28xf32>
      %c0_35 = arith.constant 0 : index
      %c0_36 = arith.constant 0 : index
      %38 = vector.load %arg10[%c0_35, %c0_36] : memref<2x28xf32, #tpu.memory_space<vmem>>, vector<2x28xf32>
      tpu.vector_store %arg10[%c0_35, %c0_36], %37 {strides = array<i32>} : memref<2x28xf32, #tpu.memory_space<vmem>>, vector<2x28xf32>,
    } else {
    }
    return
  }
  func.func @transform_0(%arg0: i32, %arg1: i32) -> (i32, i32, i32) {
    %c0_i32 = arith.constant 0 : i32
    %c0_i32_0 = arith.constant 0 : i32
    return %arg1, %arg0, %c0_i32 : i32, i32, i32
  }
  func.func @transform_1(%arg0: i32, %arg1: i32) -> (i32, i32, i32) {
    %c0_i32 = arith.constant 0 : i32
    %c0_i32_0 = arith.constant 0 : i32
    return %arg1, %arg0, %c0_i32 : i32, i32, i32
  }
  func.func @transform_2(%arg0: i32, %arg1: i32) -> (i32, i32) {
    %c0_i32 = arith.constant 0 : i32
    %c0_i32_0 = arith.constant 0 : i32
    %c0_i32_1 = arith.constant 0 : i32
    return %c0_i32, %c0_i32_0 : i32, i32
  }
  func.func @transform_3(%arg0: i32, %arg1: i32) -> (i32, i32) {
    %c0_i32 = arith.constant 0 : i32
    %c0_i32_0 = arith.constant 0 : i32
    %c0_i32_1 = arith.constant 0 : i32
    return %c0_i32, %c0_i32_0 : i32, i32
  }
  func.func @transform_4(%arg0: i32, %arg1: i32) -> (i32, i32) {
    %c0_i32 = arith.constant 0 : i32
    %c0_i32_0 = arith.constant 0 : i32
    %c0_i32_1 = arith.constant 0 : i32
    return %c0_i32, %c0_i32_0 : i32, i32
  }
  func.func @transform_5(%arg0: i32, %arg1: i32) -> (i32, i32) {
    %c0_i32 = arith.constant 0 : i32
    %c0_i32_0 = arith.constant 0 : i32
    %c0_i32_1 = arith.constant 0 : i32
    return %c0_i32, %c0_i32_0 : i32, i32
  }
  func.func @transform_6(%arg0: i32, %arg1: i32) -> (i32, i32, i32) {
    %c0_i32 = arith.constant 0 : i32
    %c0_i32_0 = arith.constant 0 : i32
    return %arg0, %arg1, %c0_i32 : i32, i32, i32
  }
  func.func @transform_7(%arg0: i32, %arg1: i32) -> (i32, i32) {
    %c0_i32 = arith.constant 0 : i32
    %c0_i32_0 = arith.constant 0 : i32
    return %arg0, %c0_i32 : i32, i32
  }
  func.func @transform_8(%arg0: i32, %arg1: i32) -> (i32, i32) {
    %c0_i32 = arith.constant 0 : i32
    %c0_i32_0 = arith.constant 0 : i32
    return %arg0, %c0_i32 : i32, i32
  }
}

</mosaic_0001>

<llo_original>
// kernel: tpu_custom_call.1
$region0: #{tpu_custom_call.1}
  #allocation0 [shape = 'u32[]', space=smem, size = 0x4, offset = 0x4, fixed_abs, tag = 'smem constant byte address 0x4 - core index']
  #allocation1 [shape = 'u32[144,128]{1,0:T(1,128)}', space=vmem, size = 0x12000, scoped, tag = 'internal scratch']
  #allocation2 [shape = 'f32[2,32]{1,0:T(2,128)}', space=vmem, size = 0x400, scoped, tag = 'scratch operand']
  #allocation3 [shape = 'f32[2,32]{1,0:T(2,128)}', space=vmem, size = 0x400, scoped, tag = 'scratch operand']
  #allocation4 [shape = 'f32[1,1]{1,0:T(1,128)S(1)}', space=vmem, size = 0x200, scoped, tag = 'scoped memory for tpu_custom_call.1']
  %s0 = inlined_call_operand.hbm [shape: f32[16,2,32], index: 0, kind: input, shape index: {}]
  %s1 = inlined_call_operand.hbm [shape: f32[16,2,32], index: 1, kind: input, shape index: {}]
  %s2 = inlined_call_operand.vmem [shape: f32[1,32], index: 2, kind: input, shape index: {}]
  %s3 = inlined_call_operand.<no memory space> [shape: f32[1,1], index: 3, kind: input, shape index: {}]
  %s4 = inlined_call_operand.hbm [shape: f32[32,56], index: 4, kind: input, shape index: {}]
  %s5 = inlined_call_operand.vmem [shape: f32[1,56], index: 5, kind: input, shape index: {}]
  %s6 = inlined_call_operand.vmem [shape: f32[1,16,2], index: 6, kind: output, shape index: {0}]
  %s7 = inlined_call_operand.hbm [shape: f32[2,28], index: 7, kind: output, shape index: {1}]
  %s8 = inlined_call_operand.hbm [shape: f32[2,28], index: 8, kind: output, shape index: {2}]
  %9 = xla_tuple %s6, %s7, %s8
  %s10 = sld [smem:[#allocation0]]
  $region93: #{tpu_custom_call.1} parent=0
    _
  %s12 = ssub.s32 1, %s10
  %s13 = scalar_select 0, %s12, %s10
  %v14 = vstv %s3
  %15 = vst [vmem:[#allocation4] sm:$0x1] %v14
  $region1: #{tpu_custom_call.1} parent=0
    #allocation5 [shape = 'u8[16384]{0}', space=vmem, size = 0x4000, scoped, tag = 'input window, operand 0']
    #allocation6 [shape = 's32[2]{0}', space=sflag, size = 0x8, scoped, tag = 'scoped memory for tpu_custom_call.1']
    #allocation7 [shape = 's32[2]{0}', space=sflag, size = 0x8, scoped, tag = 'scoped memory for tpu_custom_call.1']
    #allocation8 [shape = 'u8[16384]{0}', space=vmem, size = 0x4000, scoped, tag = 'input window, operand 1']
    #allocation9 [shape = 's32[2]{0}', space=sflag, size = 0x8, scoped, tag = 'scoped memory for tpu_custom_call.1']
    #allocation10 [shape = 'u8[16384]{0}', space=vmem, size = 0x4000, scoped, tag = 'input window, operand 4, single buffered']
    #allocation11 [shape = 'u8[1024]{0}', space=vmem, size = 0x400, scoped, tag = 'output window, operand 1, single buffered']
    #allocation12 [shape = 'u8[1024]{0}', space=vmem, size = 0x400, scoped, tag = 'output window, operand 2, single buffered']
    #allocation13 [shape = 's32[1]{0}', space=sflag, size = 0x4, scoped, tag = 'scoped memory for tpu_custom_call.1']
    %16 = vsyncpa [#allocation6], 0
    %s17 = scalar_lea.sflag [#allocation6], 1
    %18 = vsyncpa %s17, 0
    %19 = vsyncpa [#allocation9], 0
    %s20 = scalar_lea.sflag [#allocation9], 1
    %21 = vsyncpa %s20, 0
    %22 = vsyncpa [#allocation7], 0
    %23 = vsyncpa [#allocation13], 0
    loop: start=0, step=1, limit=4
    $region2: #{tpu_custom_call.1} parent=1 // loop_pre_header
      _
    $region3: #{tpu_custom_call.1} parent=1 // loop_header
      %s25 = sphi 0, %s29
      %p26 = scmp.ge.s32.totalorder %s25, 4
      %s32 = sphi 0, %s44
      %s33 = sphi 0, %s40
      %s34 = sphi 0, %s32
      %s35 = sphi 0, %s33
      %s36 = sphi 0, %s34
      %s37 = sphi 0, %s35
      %s49 = sphi 0, %s51
      %s52 = sphi 0, %s49
      %s53 = sphi 0, %s52
      %s69 = sphi 0, %s53
      %s77 = sphi 0, %s79
      %s80 = sphi 0, %s77
      %s81 = sphi 0, %s80
      %s97 = sphi 0, %s81
      %s101 = sphi 0, %s101
      %s103 = sphi 0, %s101
      %s104 = sphi 0, %s103
      %s118 = sphi 0, %s104
      %s122 = sphi 0, %s122
      %s124 = sphi 0, %s122
      %s125 = sphi 0, %s124
      %s139 = sphi 0, %s125
      %s143 = sphi 0, %s143
      %s145 = sphi 0, %s143
      %s146 = sphi 0, %s145
      %s160 = sphi 0, %s146
      %s164 = sphi 0, %s164
      %s166 = sphi 0, %s164
      %s167 = sphi 0, %s166
      %s181 = sphi 0, %s167
      %s189 = sphi 0, %s191
      %s192 = sphi 0, %s189
      %s193 = sphi 0, %s192
      %s209 = sphi 0, %s193
      %s215 = sphi 0, %s217
      %s218 = sphi 0, %s215
      %s219 = sphi 0, %s218
      %s235 = sphi 0, %s219
      %s241 = sphi 0, %s243
      %s244 = sphi 0, %s241
      %s245 = sphi 0, %s244
      %s261 = sphi 0, %s245
    $region4: #{tpu_custom_call.1} parent=1 // loop_header_branch
      %28 = sbr.rel (%p26) target = $region8
    $region5: #{tpu_custom_call.1} parent=1 // loop_body
      %s30 = ssub.s32 %s25, 1
      %s31 = ssub.s32 %s25, 2
      %s38 = sadd.s32 1, %s33
      %p39 = scmp.ge.s32.totalorder %s38, 2
      %s40 = scalar_select %p39, 0, %s38
      %s41 = sadd.s32 1, %s32
      %s42 = scalar_select %p39, %s41, %s32
      %p43 = scmp.ge.s32.totalorder %s42, 1
      %s44 = scalar_select %p43, 0, %s42
      %s45 = ssub.s32 %s33, %s40
      %s46 = ssub.s32 %s32, %s44
      %s47 = sor.u32 %s45, %s46
      %p48 = scmp.eq.s32.totalorder %s47, 0
      %s50 = sadd.s32 %s49, 1
      %s51 = scalar_select %p48, %s49, %s50
      %p54 = pneg %p48
      %p55 = scmp.eq.s32.totalorder %s25, 1
      %p56 = por %p54, %p55
      %p57 = scmp.ne.s32.totalorder %s49, %s52
      %p58 = scmp.eq.s32.totalorder %s25, 0
      %p59 = por %p57, %p58
      %p60 = scmp.ne.s32.totalorder %s49, %s52
      %p61 = scmp.eq.s32.totalorder %s30, 1
      %p62 = por %p60, %p61
      %p63 = scmp.ne.s32.totalorder %s52, %s53
      %p64 = scmp.eq.s32.totalorder %s30, 0
      %p65 = por %p63, %p64
      %p66 = scmp.ne.s32.totalorder %s52, %s53
      %p67 = scmp.eq.s32.totalorder %s31, 1
      %p68 = por %p66, %p67
      %p70 = scmp.ne.s32.totalorder %s53, %s69
      %p71 = scmp.eq.s32.totalorder %s31, 0
      %p72 = por %p70, %p71
      %s73 = ssub.s32 %s33, %s40
      %s74 = ssub.s32 %s32, %s44
      %s75 = sor.u32 %s73, %s74
      %p76 = scmp.eq.s32.totalorder %s75, 0
      %s78 = sadd.s32 %s77, 1
      %s79 = scalar_select %p76, %s77, %s78
      %p82 = pneg %p76
      %p83 = scmp.eq.s32.totalorder %s25, 1
      %p84 = por %p82, %p83
      %p85 = scmp.ne.s32.totalorder %s77, %s80
      %p86 = scmp.eq.s32.totalorder %s25, 0
      %p87 = por %p85, %p86
      %p88 = scmp.ne.s32.totalorder %s77, %s80
      %p89 = scmp.eq.s32.totalorder %s30, 1
      %p90 = por %p88, %p89
      %p91 = scmp.ne.s32.totalorder %s80, %s81
      %p92 = scmp.eq.s32.totalorder %s30, 0
      %p93 = por %p91, %p92
      %p94 = scmp.ne.s32.totalorder %s80, %s81
      %p95 = scmp.eq.s32.totalorder %s31, 1
      %p96 = por %p94, %p95
      %p98 = scmp.ne.s32.totalorder %s81, %s97
      %p99 = scmp.eq.s32.totalorder %s31, 0
      %p100 = por %p98, %p99
      %s102 = sadd.s32 %s101, 1
      %p105 = scmp.eq.s32.totalorder %s25, 1
      %p106 = scmp.ne.s32.totalorder %s101, %s103
      %p107 = scmp.eq.s32.totalorder %s25, 0
      %p108 = por %p106, %p107
      %p109 = scmp.ne.s32.totalorder %s101, %s103
      %p110 = scmp.eq.s32.totalorder %s30, 1
      %p111 = por %p109, %p110
      %p112 = scmp.ne.s32.totalorder %s103, %s104
      %p113 = scmp.eq.s32.totalorder %s30, 0
      %p114 = por %p112, %p113
      %p115 = scmp.ne.s32.totalorder %s103, %s104
      %p116 = scmp.eq.s32.totalorder %s31, 1
      %p117 = por %p115, %p116
      %p119 = scmp.ne.s32.totalorder %s104, %s118
      %p120 = scmp.eq.s32.totalorder %s31, 0
      %p121 = por %p119, %p120
      %s123 = sadd.s32 %s122, 1
      %p126 = scmp.eq.s32.totalorder %s25, 1
      %p127 = scmp.ne.s32.totalorder %s122, %s124
      %p128 = scmp.eq.s32.totalorder %s25, 0
      %p129 = por %p127, %p128
      %p130 = scmp.ne.s32.totalorder %s122, %s124
      %p131 = scmp.eq.s32.totalorder %s30, 1
      %p132 = por %p130, %p131
      %p133 = scmp.ne.s32.totalorder %s124, %s125
      %p134 = scmp.eq.s32.totalorder %s30, 0
      %p135 = por %p133, %p134
      %p136 = scmp.ne.s32.totalorder %s124, %s125
      %p137 = scmp.eq.s32.totalorder %s31, 1
      %p138 = por %p136, %p137
      %p140 = scmp.ne.s32.totalorder %s125, %s139
      %p141 = scmp.eq.s32.totalorder %s31, 0
      %p142 = por %p140, %p141
      %s144 = sadd.s32 %s143, 1
      %p147 = scmp.eq.s32.totalorder %s25, 1
      %p148 = scmp.ne.s32.totalorder %s143, %s145
      %p149 = scmp.eq.s32.totalorder %s25, 0
      %p150 = por %p148, %p149
      %p151 = scmp.ne.s32.totalorder %s143, %s145
      %p152 = scmp.eq.s32.totalorder %s30, 1
      %p153 = por %p151, %p152
      %p154 = scmp.ne.s32.totalorder %s145, %s146
      %p155 = scmp.eq.s32.totalorder %s30, 0
      %p156 = por %p154, %p155
      %p157 = scmp.ne.s32.totalorder %s145, %s146
      %p158 = scmp.eq.s32.totalorder %s31, 1
      %p159 = por %p157, %p158
      %p161 = scmp.ne.s32.totalorder %s146, %s160
      %p162 = scmp.eq.s32.totalorder %s31, 0
      %p163 = por %p161, %p162
      %s165 = sadd.s32 %s164, 1
      %p168 = scmp.eq.s32.totalorder %s25, 1
      %p169 = scmp.ne.s32.totalorder %s164, %s166
      %p170 = scmp.eq.s32.totalorder %s25, 0
      %p171 = por %p169, %p170
      %p172 = scmp.ne.s32.totalorder %s164, %s166
      %p173 = scmp.eq.s32.totalorder %s30, 1
      %p174 = por %p172, %p173
      %p175 = scmp.ne.s32.totalorder %s166, %s167
      %p176 = scmp.eq.s32.totalorder %s30, 0
      %p177 = por %p175, %p176
      %p178 = scmp.ne.s32.totalorder %s166, %s167
      %p179 = scmp.eq.s32.totalorder %s31, 1
      %p180 = por %p178, %p179
      %p182 = scmp.ne.s32.totalorder %s167, %s181
      %p183 = scmp.eq.s32.totalorder %s31, 0
      %p184 = por %p182, %p183
      %s185 = ssub.s32 %s32, %s44
      %s186 = ssub.s32 %s33, %s40
      %s187 = sor.u32 %s185, %s186
      %p188 = scmp.eq.s32.totalorder %s187, 0
      %s190 = sadd.s32 %s189, 1
      %s191 = scalar_select %p188, %s189, %s190
      %p194 = pneg %p188
      %p195 = scmp.eq.s32.totalorder %s25, 1
      %p196 = por %p194, %p195
      %p197 = scmp.ne.s32.totalorder %s189, %s192
      %p198 = scmp.eq.s32.totalorder %s25, 0
      %p199 = por %p197, %p198
      %p200 = scmp.ne.s32.totalorder %s189, %s192
      %p201 = scmp.eq.s32.totalorder %s30, 1
      %p202 = por %p200, %p201
      %p203 = scmp.ne.s32.totalorder %s192, %s193
      %p204 = scmp.eq.s32.totalorder %s30, 0
      %p205 = por %p203, %p204
      %p206 = scmp.ne.s32.totalorder %s192, %s193
      %p207 = scmp.eq.s32.totalorder %s31, 1
      %p208 = por %p206, %p207
      %p210 = scmp.ne.s32.totalorder %s193, %s209
      %p211 = scmp.eq.s32.totalorder %s31, 0
      %p212 = por %p210, %p211
      %s213 = ssub.s32 %s32, %s44
      %p214 = scmp.eq.s32.totalorder %s213, 0
      %s216 = sadd.s32 %s215, 1
      %s217 = scalar_select %p214, %s215, %s216
      %p220 = pneg %p214
      %p221 = scmp.eq.s32.totalorder %s25, 1
      %p222 = por %p220, %p221
      %p223 = scmp.ne.s32.totalorder %s215, %s218
      %p224 = scmp.eq.s32.totalorder %s25, 0
      %p225 = por %p223, %p224
      %p226 = scmp.ne.s32.totalorder %s215, %s218
      %p227 = scmp.eq.s32.totalorder %s30, 1
      %p228 = por %p226, %p227
      %p229 = scmp.ne.s32.totalorder %s218, %s219
      %p230 = scmp.eq.s32.totalorder %s30, 0
      %p231 = por %p229, %p230
      %p232 = scmp.ne.s32.totalorder %s218, %s219
      %p233 = scmp.eq.s32.totalorder %s31, 1
      %p234 = por %p232, %p233
      %p236 = scmp.ne.s32.totalorder %s219, %s235
      %p237 = scmp.eq.s32.totalorder %s31, 0
      %p238 = por %p236, %p237
      %s239 = ssub.s32 %s32, %s44
      %p240 = scmp.eq.s32.totalorder %s239, 0
      %s242 = sadd.s32 %s241, 1
      %s243 = scalar_select %p240, %s241, %s242
      %p246 = pneg %p240
      %p247 = scmp.eq.s32.totalorder %s25, 1
      %p248 = por %p246, %p247
      %p249 = scmp.ne.s32.totalorder %s241, %s244
      %p250 = scmp.eq.s32.totalorder %s25, 0
      %p251 = por %p249, %p250
      %p252 = scmp.ne.s32.totalorder %s241, %s244
      %p253 = scmp.eq.s32.totalorder %s30, 1
      %p254 = por %p252, %p253
      %p255 = scmp.ne.s32.totalorder %s244, %s245
      %p256 = scmp.eq.s32.totalorder %s30, 0
      %p257 = por %p255, %p256
      %p258 = scmp.ne.s32.totalorder %s244, %s245
      %p259 = scmp.eq.s32.totalorder %s31, 1
      %p260 = por %p258, %p259
      %p262 = scmp.ne.s32.totalorder %s245, %s261
      %p263 = scmp.eq.s32.totalorder %s31, 0
      %p264 = por %p262, %p263
      %p265 = scmp.le.s32.totalorder 1, %s25
      %p266 = scmp.lt.s32.totalorder %s25, 3
      %p267 = pnand %p265, %p266
      %p268 = pneg %p267
      // Predicated region
      $region9: #{tpu_custom_call.1} parent=5 // pred_check
        _
      $region10: #{tpu_custom_call.1} parent=5 // pred_check_branch
        %270 = sbr.rel (%p267) target = $region12
      $region11: #{tpu_custom_call.1} parent=5 // pred_region
        %s271 = ssub.s32 %s25, 1
        // Predicated region
        $region13: #{tpu_custom_call.1} parent=11 // pred_check
          %p272 = pneg %p114
        $region14: #{tpu_custom_call.1} parent=11 // pred_check_branch
          %274 = sbr.rel (%p272) target = $region16
        $region15: #{tpu_custom_call.1} parent=11 // pred_region
          _
        $region16: #{tpu_custom_call.1} parent=11 // pred_fallthru
          _
        // Predicated region
        $region17: #{tpu_custom_call.1} parent=11 // pred_check
          %p275 = pneg %p135
        $region18: #{tpu_custom_call.1} parent=11 // pred_check_branch
          %277 = sbr.rel (%p275) target = $region20
        $region19: #{tpu_custom_call.1} parent=11 // pred_region
          _
        $region20: #{tpu_custom_call.1} parent=11 // pred_fallthru
          _
        // Predicated region
        $region21: #{tpu_custom_call.1} parent=11 // pred_check
          %p278 = pneg %p156
        $region22: #{tpu_custom_call.1} parent=11 // pred_check_branch
          %280 = sbr.rel (%p278) target = $region24
        $region23: #{tpu_custom_call.1} parent=11 // pred_region
          %s282 = ssub.s32 512, 512
          %283 = vsyncadd [#allocation9], %s282
          %s284 = sshll.u32 [#allocation10], 4
          %s285 = int_to_ptr.vmem [resolvable:$true] %s284
          %290 = dma.hbm_to_vmem [thread:$0]  %s4, 512, %s285, [#allocation9], 128, 128, 8
        $region24: #{tpu_custom_call.1} parent=11 // pred_fallthru
          _
        // Predicated region
        $region25: #{tpu_custom_call.1} parent=11 // pred_check
          %p291 = pneg %p177
        $region26: #{tpu_custom_call.1} parent=11 // pred_check_branch
          %293 = sbr.rel (%p291) target = $region28
        $region27: #{tpu_custom_call.1} parent=11 // pred_region
          _
        $region28: #{tpu_custom_call.1} parent=11 // pred_fallthru
          _
      $region12: #{tpu_custom_call.1} parent=5 // pred_fallthru
        _
      %p294 = scmp.lt.s32.totalorder %s25, 2
      // Predicated region
      $region29: #{tpu_custom_call.1} parent=5 // pred_check
        %p295 = pneg %p294
      $region30: #{tpu_custom_call.1} parent=5 // pred_check_branch
        %297 = sbr.rel (%p295) target = $region32
      $region31: #{tpu_custom_call.1} parent=5 // pred_region
        // Predicated region
        $region33: #{tpu_custom_call.1} parent=31 // pred_check
          %p298 = pneg %p59
        $region34: #{tpu_custom_call.1} parent=31 // pred_check_branch
          %300 = sbr.rel (%p298) target = $region36
        $region35: #{tpu_custom_call.1} parent=31 // pred_region
          %s301 = sand.u32 %s49, 1
          %s302 = scalar_lea.sflag [#allocation6], %s301
          %s303 = sand.u32 %s49, 1
          %s304 = smul.addr %s303, 16
          %s305 = scalar_lea.vmem [#allocation5], %s304
          %s306 = smul.u32 8, %s33
          %s308 = ssub.s32 256, 256
          %309 = vsyncadd %s302, %s308
          %s310 = sadd.s32 %s32, %s306
          %s311 = smul.addr %s310, 32
          %s312 = scalar_lea.hbm %s0, %s311
          %s313 = sshll.u32 %s305, 4
          %s314 = int_to_ptr.vmem [resolvable:$true] %s313
          %319 = dma.hbm_to_vmem [thread:$0]  %s312, 256, %s314, %s302, 32, 32, 2
        $region36: #{tpu_custom_call.1} parent=31 // pred_fallthru
          _
        // Predicated region
        $region37: #{tpu_custom_call.1} parent=31 // pred_check
          %p320 = pneg %p87
        $region38: #{tpu_custom_call.1} parent=31 // pred_check_branch
          %322 = sbr.rel (%p320) target = $region40
        $region39: #{tpu_custom_call.1} parent=31 // pred_region
          %s323 = sand.u32 %s25, 1
          %s324 = scalar_lea.sflag [#allocation9], %s323
          %s325 = sand.u32 %s77, 1
          %s326 = smul.addr %s325, 16
          %s327 = scalar_lea.vmem [#allocation8], %s326
          %s328 = smul.u32 8, %s33
          %s330 = ssub.s32 256, 256
          %331 = vsyncadd %s324, %s330
          %s332 = sadd.s32 %s32, %s328
          %s333 = smul.addr %s332, 32
          %s334 = scalar_lea.hbm %s1, %s333
          %s335 = sshll.u32 %s327, 4
          %s336 = int_to_ptr.vmem [resolvable:$true] %s335
          %341 = dma.hbm_to_vmem [thread:$0]  %s334, 256, %s336, %s324, 32, 32, 2
        $region40: #{tpu_custom_call.1} parent=31 // pred_fallthru
          _
      $region32: #{tpu_custom_call.1} parent=5 // pred_fallthru
        _
      %p342 = scmp.le.s32.totalorder 1, %s25
      %p343 = scmp.lt.s32.totalorder %s25, 3
      %p344 = pnand %p342, %p343
      %p345 = pneg %p344
      // Predicated region
      $region41: #{tpu_custom_call.1} parent=5 // pred_check
        _
      $region42: #{tpu_custom_call.1} parent=5 // pred_check_branch
        %347 = sbr.rel (%p344) target = $region44
      $region43: #{tpu_custom_call.1} parent=5 // pred_region
        %s348 = ssub.s32 %s25, 1
        %s349 = sand.u32 %s52, 1
        %s350 = scalar_lea.sflag [#allocation6], %s349
        %s351 = sand.u32 %s52, 1
        %s352 = smul.addr %s351, 16
        %s353 = scalar_lea.vmem [#allocation5], %s352
        // Predicated region
        $region45: #{tpu_custom_call.1} parent=43 // pred_check
          %p354 = pneg %p65
        $region46: #{tpu_custom_call.1} parent=43 // pred_check_branch
          %356 = sbr.rel (%p354) target = $region48
        $region47: #{tpu_custom_call.1} parent=43 // pred_region
          %357 = dma.done %s350, 256
        $region48: #{tpu_custom_call.1} parent=43 // pred_fallthru
          _
        %s358 = sand.u32 %s30, 1
        %s359 = scalar_lea.sflag [#allocation9], %s358
        %s360 = sand.u32 %s80, 1
        %s361 = smul.addr %s360, 16
        %s362 = scalar_lea.vmem [#allocation8], %s361
        // Predicated region
        $region49: #{tpu_custom_call.1} parent=43 // pred_check
          %p363 = pneg %p93
        $region50: #{tpu_custom_call.1} parent=43 // pred_check_branch
          %365 = sbr.rel (%p363) target = $region52
        $region51: #{tpu_custom_call.1} parent=43 // pred_region
          %366 = dma.done %s359, 256
        $region52: #{tpu_custom_call.1} parent=43 // pred_fallthru
          _
        // Predicated region
        $region53: #{tpu_custom_call.1} parent=43 // pred_check
          %p367 = pneg %p156
        $region54: #{tpu_custom_call.1} parent=43 // pred_check_branch
          %369 = sbr.rel (%p367) target = $region56
        $region55: #{tpu_custom_call.1} parent=43 // pred_region
          %370 = dma.done [#allocation9], 512
        $region56: #{tpu_custom_call.1} parent=43 // pred_fallthru
          _
        %s371 = sand.u32 %s52, 1
        %s372 = scalar_lea.sflag [#allocation6], %s371
        %s373 = sand.u32 %s52, 1
        %s374 = smul.addr %s373, 16
        %s375 = scalar_lea.vmem [#allocation5], %s374
        %p376 = pneg %p65
        %p377 = pneg %p62
        %s378 = sand.u32 %s30, 1
        %s379 = scalar_lea.sflag [#allocation9], %s378
        %s380 = sand.u32 %s80, 1
        %s381 = smul.addr %s380, 16
        %s382 = scalar_lea.vmem [#allocation8], %s381
        %p383 = pneg %p93
        %p384 = pneg %p90
        %p385 = pneg %p114
        %p386 = pneg %p111
        %p387 = pneg %p135
        %p388 = pneg %p132
        %p389 = pneg %p156
        %p390 = pneg %p153
        %p391 = pneg %p177
        %p392 = pneg %p174
        %p393 = pneg %p205
        %p394 = pneg %p202
        %p395 = scmp.lt.s32.totalorder %s34, 0
        %s396 = scalar_select %p395, %s34, 0
        %p397 = scmp.lt.s32.totalorder %s35, 1
        %s398 = scalar_select %p397, %s35, 1
        %s399 = smul.addr %s396, 2
        %s400 = sadd.s32 %s398, %s399
        %s401 = smul.addr %s400, 8
        %s402 = scalar_lea.vmem %s6, %s401
        %p403 = pneg %p231
        %p404 = pneg %p228
        %p405 = pneg %p257
        %p406 = pneg %p254
        %s407 = smul.u32 8, %s35
        %s408 = smul.u32 8, %s35
        %p409 = scmp.lt.s32.totalorder %s34, 0
        %s410 = scalar_select %p409, %s34, 0
        %p411 = scmp.lt.s32.totalorder %s35, 1
        %s412 = scalar_select %p411, %s35, 1
        %s413 = smul.addr %s410, 2
        %s414 = sadd.s32 %s412, %s413
        %s415 = smul.addr %s414, 8
        %s416 = scalar_lea.vmem %s6, %s415
        %v417 = vld [vmem:[%s353] sm:$0x3]
        %v418 = vld [vmem:[%s353 + $0x2] sm:$0x3]
        %v419 = vld [vmem:[%s353 + $0x4] sm:$0x3]
        %v420 = vld [vmem:[%s353 + $0x6] sm:$0x3]
        %v421 = vld [vmem:[%s353 + $0x8] sm:$0x3]
        %v422 = vld [vmem:[%s353 + $0xa] sm:$0x3]
        %v423 = vld [vmem:[%s353 + $0xc] sm:$0x3]
        %v424 = vld [vmem:[%s353 + $0xe] sm:$0x3]
        %v425 = vld [vmem:[%s362] sm:$0x3]
        %v426 = vld [vmem:[%s362 + $0x2] sm:$0x3]
        %v427 = vld [vmem:[%s362 + $0x4] sm:$0x3]
        %v428 = vld [vmem:[%s362 + $0x6] sm:$0x3]
        %v429 = vld [vmem:[%s362 + $0x8] sm:$0x3]
        %v430 = vld [vmem:[%s362 + $0xa] sm:$0x3]
        %v431 = vld [vmem:[%s362 + $0xc] sm:$0x3]
        %v432 = vld [vmem:[%s362 + $0xe] sm:$0x3]
        %p433 = scmp.eq.s32.totalorder %s35, 0
        // Predicated region
        $region57: #{tpu_custom_call.1} parent=43 // pred_check
          %p434 = pneg %p433
        $region58: #{tpu_custom_call.1} parent=43 // pred_check_branch
          %436 = sbr.rel (%p434) target = $region60
        $region59: #{tpu_custom_call.1} parent=43 // pred_region
          %vm437 = vcmask 254976
          %438 = vst.msk [vmem:[#allocation2] sm:$0x3] %vm437, -inf
          %439 = vst.msk [vmem:[#allocation3] sm:$0x3] %vm437, -inf
        $region60: #{tpu_custom_call.1} parent=43 // pred_fallthru
          _
        %v440 = vld [vmem:[#allocation2] sm:$0x3]
        %vm441 = vcmask 254976
        %v442 = vsel %vm441, %v417, -inf
        %v443 = vsel %vm441, %v418, -inf
        %v444 = vsel %vm441, %v419, -inf
        %v445 = vsel %vm441, %v420, -inf
        %v446 = vsel %vm441, %v421, -inf
        %v447 = vmax.f32 %v442, %v446
        %v448 = vsel %vm441, %v422, -inf
        %v449 = vmax.f32 %v443, %v448
        %v450 = vsel %vm441, %v423, -inf
        %v451 = vmax.f32 %v444, %v450
        %v452 = vsel %vm441, %v424, -inf
        %v453 = vmax.f32 %v445, %v452
        %v454 = vmax.f32 %v447, %v449
        %v455 = vmax.f32 %v451, %v453
        %v456 = vmax.f32 %v454, %v455
        %v457 = vmax.f32 %v440, %v456
        %458 = vst.msk [vmem:[#allocation2] sm:$0x3] %vm441, %v457
        %v459 = vld [vmem:[#allocation3] sm:$0x3]
        %v460 = vsel %vm441, %v425, -inf
        %v461 = vsel %vm441, %v426, -inf
        %v462 = vsel %vm441, %v427, -inf
        %v463 = vsel %vm441, %v428, -inf
        %v464 = vsel %vm441, %v429, -inf
        %v465 = vmax.f32 %v460, %v464
        %v466 = vsel %vm441, %v430, -inf
        %v467 = vmax.f32 %v461, %v466
        %v468 = vsel %vm441, %v431, -inf
        %v469 = vmax.f32 %v462, %v468
        %v470 = vsel %vm441, %v432, -inf
        %v471 = vmax.f32 %v463, %v470
        %v472 = vmax.f32 %v465, %v467
        %v473 = vmax.f32 %v469, %v471
        %v474 = vmax.f32 %v472, %v473
        %v475 = vmax.f32 %v459, %v474
        %476 = vst.msk [vmem:[#allocation3] sm:$0x3] %vm441, %v475
        %v477 = vld [vmem:[%s2] sm:$0x1]
        %v479 = vlaneseq
        %v480 = vshrl.u32 %v479, 7
        %v481 = vsub.s32 0, %v480
        %v482 = vrot.slane %v477, %v481
        %v484 = vmul.f32 %v417, %v482
        %v485 = vmul.f32 %v418, %v482
        %v486 = vmul.f32 %v419, %v482
        %v487 = vmul.f32 %v420, %v482
        %v488 = vmul.f32 %v421, %v482
        %v489 = vmul.f32 %v422, %v482
        %v490 = vmul.f32 %v423, %v482
        %v491 = vmul.f32 %v424, %v482
        %v492 = vsel %vm441, %v484, 0.0
        %493 = vadd.xlane.f32.xlu0 %v492
        %v494 = vpop.xlane.xlu0 %493
        %v495 = vsel %vm441, %v485, 0.0
        %496 = vadd.xlane.f32.xlu0 %v495
        %v497 = vpop.xlane.xlu0 %496
        %v498 = vsel %vm441, %v486, 0.0
        %499 = vadd.xlane.f32.xlu0 %v498
        %v500 = vpop.xlane.xlu0 %499
        %v501 = vsel %vm441, %v487, 0.0
        %502 = vadd.xlane.f32.xlu0 %v501
        %v503 = vpop.xlane.xlu0 %502
        %v504 = vsel %vm441, %v488, 0.0
        %505 = vadd.xlane.f32.xlu0 %v504
        %v506 = vpop.xlane.xlu0 %505
        %v507 = vsel %vm441, %v489, 0.0
        %508 = vadd.xlane.f32.xlu0 %v507
        %v509 = vpop.xlane.xlu0 %508
        %v510 = vsel %vm441, %v490, 0.0
        %511 = vadd.xlane.f32.xlu0 %v510
        %v512 = vpop.xlane.xlu0 %511
        %v513 = vsel %vm441, %v491, 0.0
        %514 = vadd.xlane.f32.xlu0 %v513
        %v515 = vpop.xlane.xlu0 %514
        %v516 = vld [vmem:[#allocation4] sm:$0x1]
        %v518 = vlaneseq
        %v519 = vshrl.u32 %v518, 7
        %v520 = vsub.s32 0, %v519
        %v521 = vrot.slane %v516, %v520
        %522 = vset.pattern.permute.xlu0 0
        %523 = vperm.xlu0 %522, %v521
        %v524 = vpop.permute.xlu0 %523
        %v526 = vadd.f32 %v494, %v524
        %v527 = vadd.f32 %v497, %v524
        %v528 = vadd.f32 %v500, %v524
        %v529 = vadd.f32 %v503, %v524
        %v530 = vadd.f32 %v506, %v524
        %v531 = vadd.f32 %v509, %v524
        %v532 = vadd.f32 %v512, %v524
        %v533 = vadd.f32 %v515, %v524
        %v542 = vlaneseq
        %v543 = vand.u32 %v542, 127
        %v544 = vlaneseq
        %v545 = vshrl.u32 %v544, 7
        %v546 = vsub.s32 %v543, %v545
        %v547 = vrot.slane %v526, %v546
        %v548 = vlaneseq
        %v549 = vshrl.u32 %v548, 7
        %v550 = vsub.s32 %v543, %v549
        %v551 = vrot.slane %v527, %v550
        %v552 = vlaneseq
        %v553 = vshrl.u32 %v552, 7
        %v554 = vsub.s32 %v543, %v553
        %v555 = vrot.slane %v528, %v554
        %v556 = vlaneseq
        %v557 = vshrl.u32 %v556, 7
        %v558 = vsub.s32 %v543, %v557
        %v559 = vrot.slane %v529, %v558
        %v560 = vlaneseq
        %v561 = vshrl.u32 %v560, 7
        %v562 = vsub.s32 %v543, %v561
        %v563 = vrot.slane %v530, %v562
        %v564 = vlaneseq
        %v565 = vshrl.u32 %v564, 7
        %v566 = vsub.s32 %v543, %v565
        %v567 = vrot.slane %v531, %v566
        %v568 = vlaneseq
        %v569 = vshrl.u32 %v568, 7
        %v570 = vsub.s32 %v543, %v569
        %v571 = vrot.slane %v532, %v570
        %v572 = vlaneseq
        %v573 = vshrl.u32 %v572, 7
        %v574 = vsub.s32 %v543, %v573
        %v575 = vrot.slane %v533, %v574
        %vm576 = vcmask 1041409
        %v577 = vsel %vm576, %v551, %v547
        %vm578 = vcmask 1042434
        %v579 = vsel %vm578, %v555, %v577
        %vm580 = vcmask 1043459
        %v581 = vsel %vm580, %v559, %v579
        %vm582 = vcmask 1044484
        %v583 = vsel %vm582, %v563, %v581
        %vm584 = vcmask 1045509
        %v585 = vsel %vm584, %v567, %v583
        %vm586 = vcmask 1046534
        %v587 = vsel %vm586, %v571, %v585
        %vm588 = vcmask 1047559
        %v589 = vsel %vm588, %v575, %v587
        %vm591 = vcmask 15360
        %592 = vst.msk [vmem:[%s416] sm:$0xff] %vm591, %v589
        %p593 = scmp.eq.s32.totalorder %s35, 1
        // Predicated region
        $region61: #{tpu_custom_call.1} parent=43 // pred_check
          %p594 = pneg %p593
        $region62: #{tpu_custom_call.1} parent=43 // pred_check_branch
          %596 = sbr.rel (%p594) target = $region64
        $region63: #{tpu_custom_call.1} parent=43 // pred_region
          %v597 = vld [vmem:[#allocation2] sm:$0x3]
          %v598 = vld [vmem:[#allocation3] sm:$0x3]
          %v600 = vrot.slane %v598, 6
          %vm602 = vcmask 1041408
          %v603 = vsel %vm602, %v597, %v600
          %v604 = vld [vmem:[#allocation10] sm:$0xff]
          %v605 = vld [vmem:[#allocation10 + $0x8] sm:$0xff]
          %v606 = vld [vmem:[#allocation10 + $0x10] sm:$0xff]
          %v607 = vld [vmem:[#allocation10 + $0x18] sm:$0xff]
          %v608 = vld [vmem:[%s5] sm:$0x1]
          %v610 = vlaneseq
          %v611 = vshrl.u32 %v610, 7
          %v612 = vsub.s32 0, %v611
          %v613 = vrot.slane %v608, %v612
          %vm615 = vcmask 261120
          %v617 = vsel %vm615, %v603, 0
          %619 = vmatprep.subr.mxu0 0.0
          %620 = vmatpush1.msra.mxu0 %v604
          %621 = vmatprep.subr.mxu0 0.0
          %622 = vmatpush1.msra.mxu0 %v605
          %623 = vmatprep.subr.mxu0 0.0
          %624 = vmatpush1.msra.mxu0 %v606
          %625 = vmatprep.subr.mxu0 0.0
          %626 = vmatpush1.msra.mxu0 %v607
          %627 = vmatprep.subr.mxu0 0.0
          %628 = vmatpush1.msra.mxu0 0.0
          %629 = vmatprep.subr.mxu0 0.0
          %630 = vmatpush1.msra.mxu0 0.0
          %631 = vmatprep.subr.mxu0 0.0
          %632 = vmatpush1.msra.mxu0 0.0
          %633 = vmatprep.subr.mxu0 0.0
          %634 = vmatpush1.msra.mxu0 0.0
          %635 = vmatprep.subr.mxu0 0.0
          %636 = vmatpush1.msra.mxu0 0.0
          %637 = vmatprep.subr.mxu0 0.0
          %638 = vmatpush1.msra.mxu0 0.0
          %639 = vmatprep.subr.mxu0 0.0
          %640 = vmatpush1.msra.mxu0 0.0
          %641 = vmatprep.subr.mxu0 0.0
          %642 = vmatpush1.msra.mxu0 0.0
          %643 = vmatprep.subr.mxu0 0.0
          %644 = vmatpush1.msra.mxu0 0.0
          %645 = vmatprep.subr.mxu0 0.0
          %646 = vmatpush1.msra.mxu0 0.0
          %647 = vmatprep.subr.mxu0 0.0
          %648 = vmatpush1.msra.mxu0 0.0
          %649 = vmatprep.subr.mxu0 0.0
          %650 = vmatpush1.msra.mxu0 0.0
          %651 = vmatprep.subr.mxu0 0.0
          %652 = vmatpush1.msra.mxu0 0.0
          %653 = vmatprep.subr.mxu0 0.0
          %654 = vmatpush1.msra.mxu0 0.0
          %655 = vmatprep.subr.mxu0 0.0
          %656 = vmatpush1.msra.mxu0 0.0
          %657 = vmatprep.subr.mxu0 0.0
          %658 = vmatpush1.msra.mxu0 0.0
          %659 = vmatprep.subr.mxu0 0.0
          %660 = vmatpush1.msra.mxu0 0.0
          %661 = vmatprep.subr.mxu0 0.0
          %662 = vmatpush1.msra.mxu0 0.0
          %663 = vmatprep.subr.mxu0 0.0
          %664 = vmatpush1.msra.mxu0 0.0
          %665 = vmatprep.subr.mxu0 0.0
          %666 = vmatpush1.msra.mxu0 0.0
          %667 = vmatprep.subr.mxu0 0.0
          %668 = vmatpush1.msra.mxu0 0.0
          %669 = vmatprep.subr.mxu0 0.0
          %670 = vmatpush1.msra.mxu0 0.0
          %671 = vmatprep.subr.mxu0 0.0
          %672 = vmatpush1.msra.mxu0 0.0
          %673 = vmatprep.subr.mxu0 0.0
          %674 = vmatpush1.msra.mxu0 0.0
          %675 = vmatprep.subr.mxu0 0.0
          %676 = vmatpush1.msra.mxu0 0.0
          %677 = vmatprep.subr.mxu0 0.0
          %678 = vmatpush1.msra.mxu0 0.0
          %679 = vmatprep.subr.mxu0 0.0
          %680 = vmatpush1.msra.mxu0 0.0
          %681 = vmatprep.subr.mxu0 0.0
          %682 = vmatpush1.msra.mxu0 0.0
          %683 = vmatprep.mubr.f32.mxu0 0.0
          %684 = vmatmul.mubr.f32.gmra.mrb[0].mxu0 %v617
          %v685 = vpop.f32.mrb[0].mxu0
          %v686 = vadd.f32 %v613, %v685
          %v687 = vpop.f32.mrb[0].mxu0
          %688 = vdwg.mxu0
          %vm689 = vcmask 222208
          %690 = vst.msk [vmem:[#allocation11] sm:$0x3] %vm689, %v686
          %692 = vrot.lane.b32.xlu0 %v686, 100
          %v693 = vpop.permute.xlu0 %692
          %vm695 = vcmask 224258
          %696 = vst.msk [vmem:[#allocation12 - $0x2] sm:$0xc] %vm695, %v693
        $region64: #{tpu_custom_call.1} parent=43 // pred_fallthru
          _
        %p697 = scmp.lt.s32.totalorder %s34, 0
        %s698 = scalar_select %p697, %s34, 0
        %p699 = scmp.lt.s32.totalorder %s35, 1
        %s700 = scalar_select %p699, %s35, 1
        %s701 = smul.addr %s698, 2
        %s702 = sadd.s32 %s700, %s701
        %s703 = smul.addr %s702, 8
        %s704 = scalar_lea.vmem %s6, %s703
        // Predicated region
        $region65: #{tpu_custom_call.1} parent=43 // pred_check
          %p705 = pneg %p202
        $region66: #{tpu_custom_call.1} parent=43 // pred_check_branch
          %707 = sbr.rel (%p705) target = $region68
        $region67: #{tpu_custom_call.1} parent=43 // pred_region
          _
        $region68: #{tpu_custom_call.1} parent=43 // pred_fallthru
          _
        // Predicated region
        $region69: #{tpu_custom_call.1} parent=43 // pred_check
          %p708 = pneg %p228
        $region70: #{tpu_custom_call.1} parent=43 // pred_check_branch
          %710 = sbr.rel (%p708) target = $region72
        $region71: #{tpu_custom_call.1} parent=43 // pred_region
          %s712 = ssub.s32 32, 32
          %713 = vsyncadd [#allocation7], %s712
          %s714 = smul.addr %s34, 32
          %s715 = scalar_lea.hbm %s7, %s714
          %s717 = sshll.u32 [#allocation11], 4
          %s718 = int_to_ptr.vmem [resolvable:$true] %s717
          %720 = dma.vmem_to_hbm [thread:$0]  %s718, 32, %s715, [#allocation7]
        $region72: #{tpu_custom_call.1} parent=43 // pred_fallthru
          _
        // Predicated region
        $region73: #{tpu_custom_call.1} parent=43 // pred_check
          %p721 = pneg %p254
        $region74: #{tpu_custom_call.1} parent=43 // pred_check_branch
          %723 = sbr.rel (%p721) target = $region76
        $region75: #{tpu_custom_call.1} parent=43 // pred_region
          %s725 = ssub.s32 32, 32
          %726 = vsyncadd [#allocation13], %s725
          %s727 = smul.addr %s34, 32
          %s728 = scalar_lea.hbm %s8, %s727
          %s730 = sshll.u32 [#allocation12], 4
          %s731 = int_to_ptr.vmem [resolvable:$true] %s730
          %733 = dma.vmem_to_hbm [thread:$0]  %s731, 32, %s728, [#allocation13]
        $region76: #{tpu_custom_call.1} parent=43 // pred_fallthru
          _
        // Predicated region
        $region77: #{tpu_custom_call.1} parent=43 // pred_check
          %p734 = pneg %p228
        $region78: #{tpu_custom_call.1} parent=43 // pred_check_branch
          %736 = sbr.rel (%p734) target = $region80
        $region79: #{tpu_custom_call.1} parent=43 // pred_region
          %737 = dma.done [#allocation7], 32
        $region80: #{tpu_custom_call.1} parent=43 // pred_fallthru
          _
        // Predicated region
        $region81: #{tpu_custom_call.1} parent=43 // pred_check
          %p738 = pneg %p254
        $region82: #{tpu_custom_call.1} parent=43 // pred_check_branch
          %740 = sbr.rel (%p738) target = $region84
        $region83: #{tpu_custom_call.1} parent=43 // pred_region
          %741 = dma.done [#allocation13], 32
        $region84: #{tpu_custom_call.1} parent=43 // pred_fallthru
          _
      $region44: #{tpu_custom_call.1} parent=5 // pred_fallthru
        _
      %p742 = scmp.le.s32.totalorder 2, %s25
      // Predicated region
      $region85: #{tpu_custom_call.1} parent=5 // pred_check
        %p743 = pneg %p742
      $region86: #{tpu_custom_call.1} parent=5 // pred_check_branch
        %745 = sbr.rel (%p743) target = $region88
      $region87: #{tpu_custom_call.1} parent=5 // pred_region
        %s746 = ssub.s32 %s25, 2
        // Predicated region
        $region89: #{tpu_custom_call.1} parent=87 // pred_check
          %p747 = pneg %p208
        $region90: #{tpu_custom_call.1} parent=87 // pred_check_branch
          %749 = sbr.rel (%p747) target = $region92
        $region91: #{tpu_custom_call.1} parent=87 // pred_region
          %p750 = scmp.lt.s32.totalorder %s36, 0
          %s751 = scalar_select %p750, %s36, 0
          %p752 = scmp.lt.s32.totalorder %s37, 1
          %s753 = scalar_select %p752, %s37, 1
          %s754 = smul.addr %s751, 2
          %s755 = sadd.s32 %s753, %s754
          %s756 = smul.addr %s755, 8
          %s757 = scalar_lea.vmem %s6, %s756
        $region92: #{tpu_custom_call.1} parent=87 // pred_fallthru
          _
      $region88: #{tpu_custom_call.1} parent=5 // pred_fallthru
        _
    $region6: #{tpu_custom_call.1} parent=1 // loop_footer
      %s29 = sadd.s32 1, %s25
    $region7: #{tpu_custom_call.1} parent=1 // loop_footer_branch
      %24 = sbr.rel target = $region3
    $region8: #{tpu_custom_call.1} parent=1 // loop_exit
      _
    %758 = vsyncpa [#allocation6], 1
    %s759 = scalar_lea.sflag [#allocation6], 1
    %760 = vsyncpa %s759, 1
    %761 = vsyncpa [#allocation9], 1
    %s762 = scalar_lea.sflag [#allocation9], 1
    %763 = vsyncpa %s762, 1
    %764 = vsyncpa [#allocation7], 1
    %s765 = scalar_lea.sflag [#allocation7], 1
    %766 = vsyncpa %s765, 1
    %767 = vsyncpa [#allocation13], 1

</llo_original>
